<compile_context>
chip_gen: v6e
topology: v6e:2x2x1
jax: 0.10.0
libtpu: 0.0.40
codegen_flags: <defaults>
</compile_context>

<pallas_src>
import functools

import jax
import jax.numpy as jnp
from jax import lax
from jax.experimental import pallas as pl
from jax.experimental.pallas import tpu as pltpu


# ----------------------------------------------------------------------------
# Kernels
# ----------------------------------------------------------------------------

def _diff_loss_kernel_3d(x1_ref, x2_ref, acc_ref, *, n_rows, tiles_per_split):
    """Streams (B, tR, 128) tiles; accumulates lane-dense per-row partials.

    acc_ref block: (1, 3, B, 128) = [s11, s22, s12] per batch row, with 128
    per-lane partials; the cross-lane reduce happens in the JAX epilogue.
    """
    k = pl.program_id(1)

    @pl.when(k == 0)
    def _init():
        acc_ref[...] = jnp.zeros_like(acc_ref)

    x1 = x1_ref[...].astype(jnp.float32)          # (B, tR, 128)
    x2 = x2_ref[...].astype(jnp.float32)

    # Mask rows of the (possibly partial) edge tile: Pallas pads edge blocks
    # with undefined data, so zero them before any arithmetic.
    tile = pl.program_id(0) * tiles_per_split + k
    rows = tile * x1.shape[1] + lax.broadcasted_iota(jnp.int32, x1.shape, 1)
    valid = rows < n_rows
    x1 = jnp.where(valid, x1, 0.0)
    x2 = jnp.where(valid, x2, 0.0)

    # Per-feature mean over the batch (axis 0) -- tile-local by construction.
    x1c = x1 - jnp.mean(x1, axis=0, keepdims=True)
    x2c = x2 - jnp.mean(x2, axis=0, keepdims=True)

    # Reduce only the tile-row (sublane) axis per step -> (B, 128) partials.
    acc_ref[0, 0, :, :] += jnp.sum(x1c * x1c, axis=1)
    acc_ref[0, 1, :, :] += jnp.sum(x2c * x2c, axis=1)
    acc_ref[0, 2, :, :] += jnp.sum(x1c * x2c, axis=1)


def _diff_loss_kernel_2d(x1_ref, x2_ref, acc_ref, *, n_cols):
    """Fallback for feature counts that are not a multiple of 128."""
    k = pl.program_id(0)

    @pl.when(k == 0)
    def _init():
        acc_ref[...] = jnp.zeros_like(acc_ref)

    x1 = x1_ref[...].astype(jnp.float32)          # (B, tD)
    x2 = x2_ref[...].astype(jnp.float32)

    cols = k * x1.shape[1] + lax.broadcasted_iota(jnp.int32, x1.shape, 1)
    valid = cols < n_cols
    x1 = jnp.where(valid, x1, 0.0)
    x2 = jnp.where(valid, x2, 0.0)

    x1c = x1 - jnp.mean(x1, axis=0, keepdims=True)
    x2c = x2 - jnp.mean(x2, axis=0, keepdims=True)

    acc_ref[0, 0, :, :] += jnp.sum(x1c * x1c, axis=1, keepdims=True)   # (B, 1)
    acc_ref[0, 1, :, :] += jnp.sum(x2c * x2c, axis=1, keepdims=True)
    acc_ref[0, 2, :, :] += jnp.sum(x1c * x2c, axis=1, keepdims=True)


# ----------------------------------------------------------------------------
# Wrapper
# ----------------------------------------------------------------------------

def _vmem_plan():
    """Per-generation (vmem_limit_bytes, tile_budget_bytes)."""
    cap = None
    try:
        cap = int(pltpu.get_tpu_info().vmem_capacity_bytes)
    except Exception:
        cap = None
    if cap is None:
        try:
            kind = jax.devices()[0].device_kind.lower()
        except Exception:
            kind = ""
        cap = (64 << 20) if "v7" in kind else (128 << 20)
    if cap >= (128 << 20):
        limit = 96 << 20                       # v5e / v6e: 128 MiB physical
    else:
        limit = min(48 << 20, max(16 << 20, (cap * 3) // 4))   # v7x-class
    return limit, int(limit * 0.7)


def _sums_3d(x1, x2, b, d, itemsize, vmem_limit, tile_budget):
    r = d // 128
    x1 = x1.reshape(b, r, 128)
    x2 = x2.reshape(b, r, 128)

    # Rows (of 128 features) per step, sized from the VMEM budget:
    # 2 inputs x 2 pipeline buffers x (b, t_r, 128) x itemsize.
    per_row = 4 * b * 128 * itemsize
    t_r = max(8, (tile_budget // per_row) // 32 * 32)
    if t_r >= r:
        t_r = r                                # whole problem in one grid step
    n_tiles = pl.cdiv(r, t_r)
    # Split the feature stream across the two TensorCores on v7x (neutral on
    # single-core chips); only when it divides evenly so index maps stay in
    # bounds.
    n_split = 2 if (n_tiles >= 4 and n_tiles % 2 == 0) else 1
    tps = n_tiles // n_split

    kernel = functools.partial(_diff_loss_kernel_3d,
                               n_rows=r, tiles_per_split=tps)

    def in_map(c, k):
        return (0, c * tps + k, 0)

    cost = pl.CostEstimate(
        flops=int(12 * b * d),
        transcendentals=0,
        bytes_accessed=int(2 * b * d * itemsize + n_split * 3 * b * 128 * 4),
    )

    partials = pl.pallas_call(
        kernel,
        out_shape=jax.ShapeDtypeStruct((n_split, 3, b, 128), jnp.float32),
        grid_spec=pltpu.PrefetchScalarGridSpec(
            num_scalar_prefetch=0,
            grid=(n_split, tps),
            in_specs=[
                pl.BlockSpec((b, t_r, 128), in_map),
                pl.BlockSpec((b, t_r, 128), in_map),
            ],
            out_specs=pl.BlockSpec((1, 3, b, 128), lambda c, k: (c, 0, 0, 0)),
        ),
        compiler_params=pltpu.CompilerParams(
            dimension_semantics=("parallel", "arbitrary"),
            vmem_limit_bytes=vmem_limit,
        ),
        cost_estimate=cost,
    )(x1, x2)
    return jnp.sum(partials, axis=(0, 3))       # (3, b)


def _sums_2d(x1, x2, b, d, itemsize, vmem_limit, tile_budget):
    # Sub-32-bit dtypes pack more rows per sublane group (bf16: 16, int8: 32).
    pack = max(1, 4 // itemsize) * 8
    b_pad = pl.cdiv(b, pack) * pack
    per_col = 4 * b_pad * itemsize              # 2 inputs x 2 buffers
    t_d = max(128, (tile_budget // per_col) // 128 * 128)
    if t_d >= d:
        t_d = d
    n_tiles = pl.cdiv(d, t_d)

    kernel = functools.partial(_diff_loss_kernel_2d, n_cols=d)

    cost = pl.CostEstimate(
        flops=int(12 * b * d),
        transcendentals=0,
        bytes_accessed=int(2 * b * d * itemsize + 3 * b * 4),
    )

    partials = pl.pallas_call(
        kernel,
        out_shape=jax.ShapeDtypeStruct((1, 3, b, 1), jnp.float32),
        grid_spec=pltpu.PrefetchScalarGridSpec(
            num_scalar_prefetch=0,
            grid=(n_tiles,),
            in_specs=[
                pl.BlockSpec((b, t_d), lambda k: (0, k)),
                pl.BlockSpec((b, t_d), lambda k: (0, k)),
            ],
            out_specs=pl.BlockSpec((1, 3, b, 1), lambda k: (0, 0, 0, 0)),
        ),
        compiler_params=pltpu.CompilerParams(
            dimension_semantics=("arbitrary",),
            vmem_limit_bytes=vmem_limit,
        ),
        cost_estimate=cost,
    )(x1, x2)
    return jnp.sum(partials, axis=(0, 3))       # (3, b)


def diff_loss(input1, input2):
    """Pallas implementation of DiffLoss.forward. Returns a scalar float32."""
    b = input1.shape[0]
    x1 = input1.reshape(b, -1)                  # native dtype all the way in
    x2 = input2.reshape(b, -1)
    d = x1.shape[1]
    itemsize = jnp.dtype(x1.dtype).itemsize

    vmem_limit, tile_budget = _vmem_plan()

    if d % 128 == 0:
        sums = _sums_3d(x1, x2, b, d, itemsize, vmem_limit, tile_budget)
    else:
        sums = _sums_2d(x1, x2, b, d, itemsize, vmem_limit, tile_budget)

    # Tiny O(B) JAX epilogue: closed-form row norms and the final loss.
    s11, s22, s12 = sums[0], sums[1], sums[2]
    eps = jnp.float32(1e-6)
    n1 = jnp.sqrt(s11) + eps                    # ||x1c||_2 + 1e-6 (as in torch)
    n2 = jnp.sqrt(s22) + eps
    # TODO(synk): closed-form ||u - v||^2 cancels when x1 ~ x2 (dn -> 0);
    # identical inputs give loss = inf, matching the PyTorch module.
    dn2 = s11 / (n1 * n1) + s22 / (n2 * n2) - 2.0 * s12 / (n1 * n2)
    dn = jnp.sqrt(jnp.maximum(dn2, 0.0))
    return 1.0 / jnp.mean(dn)


# ----------------------------------------------------------------------------
# Pure-JAX reference + self-test
# ----------------------------------------------------------------------------

def _diff_loss_ref(input1, input2):
    b = input1.shape[0]
    x1 = input1.reshape(b, -1).astype(jnp.float32)
    x2 = input2.reshape(b, -1).astype(jnp.float32)
    x1 = x1 - jnp.mean(x1, axis=0, keepdims=True)
    x2 = x2 - jnp.mean(x2, axis=0, keepdims=True)
    x1 = x1 / (jnp.linalg.norm(x1, axis=1, keepdims=True) + 1e-6)
    x2 = x2 / (jnp.linalg.norm(x2, axis=1, keepdims=True) + 1e-6)
    return 1.0 / jnp.mean(jnp.linalg.norm(x1 - x2, axis=1))


if __name__ == "__main__":
    key = jax.random.PRNGKey(0)
    k1, k2, k3, k4 = jax.random.split(key, 4)

    # DiffLoss has no parameters; inputs are e.g. conv feature maps (NCHW).
    x1 = jax.random.normal(k1, (2, 4, 16, 16), dtype=jnp.float32)   # D = 1024
    x2 = jax.random.normal(k2, (2, 4, 16, 16), dtype=jnp.float32)

    loss = diff_loss(x1, x2)            # single-tile 3-D path
    jax.block_until_ready(loss)
    ref = _diff_loss_ref(x1, x2)
    assert jnp.allclose(loss, ref, rtol=1e-4, atol=1e-5), (loss, ref)

    # Ragged feature count (D = 315, not a multiple of 128) -> 2-D fallback.
    y1 = jax.random.normal(k3, (2, 5, 63), dtype=jnp.float32)
    y2 = jax.random.normal(k4, (2, 5, 63), dtype=jnp.float32)
    loss2 = diff_loss(y1, y2)
    jax.block_until_ready(loss2)
    ref2 = _diff_loss_ref(y1, y2)
    assert jnp.allclose(loss2, ref2, rtol=1e-4, atol=1e-5), (loss2, ref2)

    print("KERNEL_OK")
</pallas_src>

<mosaic_0001>
module attributes {stable_mosaic.version = 11 : i64} {
  func.func @_diff_loss_kernel_3d(%arg0: i32, %arg1: i32, %arg2: memref<2x8x128xf32, #tpu.memory_space<vmem>>, %arg3: memref<2x8x128xf32, #tpu.memory_space<vmem>>, %arg4: memref<1x3x2x128xf32, #tpu.memory_space<vmem>>) attributes {dimension_semantics = [#tpu.dimension_semantics<parallel>, #tpu.dimension_semantics<arbitrary>], iteration_bounds = array<i64: 1, 1>, scalar_prefetch = 0 : i64, scratch_operands = 0 : i64, tpu.core_type = #tpu.core_type<tc>, window_params = [{transform_indices = @transform_0, window_bounds = array<i64: 2, 8, 128>}, {transform_indices = @transform_1, window_bounds = array<i64: 2, 8, 128>}, {transform_indices = @transform_2, window_bounds = array<i64: 1, 3, 2, 128>}]} {
    %c0_i32 = arith.constant 0 : i32
    %0 = arith.cmpi eq, %arg1, %c0_i32 : i32
    %1 = arith.extui %0 : i1 to i32
    %c0_i32_0 = arith.constant 0 : i32
    %2 = arith.cmpi ne, %1, %c0_i32_0 : i32
    scf.if %2 {
      %cst_37 = arith.constant 0.000000e+00 : f32
      %53 = vector.broadcast %cst_37 : f32 to vector<1x3x2x128xf32>
      %c0_38 = arith.constant 0 : index
      %c0_39 = arith.constant 0 : index
      %c0_40 = arith.constant 0 : index
      %c0_41 = arith.constant 0 : index
      %54 = vector.load %arg4[%c0_38, %c0_39, %c0_40, %c0_41] : memref<1x3x2x128xf32, #tpu.memory_space<vmem>>, vector<1x3x2x128xf32>
      tpu.vector_store %arg4[%c0_38, %c0_39, %c0_40, %c0_41], %53 {strides = array<i32>} : memref<1x3x2x128xf32, #tpu.memory_space<vmem>>, vector<1x3x2x128xf32>,
    } else {
    }
    %c0 = arith.constant 0 : index
    %c0_1 = arith.constant 0 : index
    %c0_2 = arith.constant 0 : index
    %3 = vector.load %arg2[%c0, %c0_1, %c0_2] : memref<2x8x128xf32, #tpu.memory_space<vmem>>, vector<2x8x128xf32>
    %c0_3 = arith.constant 0 : index
    %c0_4 = arith.constant 0 : index
    %c0_5 = arith.constant 0 : index
    %4 = vector.load %arg3[%c0_3, %c0_4, %c0_5] : memref<2x8x128xf32, #tpu.memory_space<vmem>>, vector<2x8x128xf32>
    %c1_i32 = arith.constant 1 : i32
    %5 = arith.muli %arg0, %c1_i32 : i32
    %6 = arith.addi %5, %arg1 : i32
    %c8_i32 = arith.constant 8 : i32
    %7 = arith.muli %6, %c8_i32 : i32
    %8 = tpu.iota {dimensions = array<i32: 1>} : vector<2x8x128xi32>
    %9 = vector.broadcast %7 : i32 to vector<2x8x128xi32>
    %10 = arith.addi %9, %8 : vector<2x8x128xi32>
    %c8_i32_6 = arith.constant 8 : i32
    %11 = vector.broadcast %c8_i32_6 : i32 to vector<2x8x128xi32>
    %12 = arith.cmpi slt, %10, %11 : vector<2x8x128xi32>
    %cst = arith.constant 0.000000e+00 : f32
    %13 = vector.broadcast %cst : f32 to vector<2x8x128xf32>
    %14 = arith.select %12, %3, %13 : vector<2x8x128xi1>, vector<2x8x128xf32>
    %cst_7 = arith.constant 0.000000e+00 : f32
    %15 = vector.broadcast %cst_7 : f32 to vector<2x8x128xf32>
    %16 = arith.select %12, %4, %15 : vector<2x8x128xi1>, vector<2x8x128xf32>
    %cst_8 = arith.constant dense<0.000000e+00> : vector<8x128xf32>
    %17 = vector.multi_reduction <add>, %14, %cst_8 [0] : vector<2x8x128xf32> to vector<8x128xf32>
    %18 = vector.shape_cast %17 : vector<8x128xf32> to vector<1x8x128xf32>
    %cst_9 = arith.constant 2.000000e+00 : f32
    %19 = vector.broadcast %cst_9 : f32 to vector<1x8x128xf32>
    %20 = arith.divf %18, %19 : vector<1x8x128xf32>
    %21 = vector.broadcast %20 : vector<1x8x128xf32> to vector<2x8x128xf32>
    %22 = arith.subf %14, %21 : vector<2x8x128xf32>
    %cst_10 = arith.constant dense<0.000000e+00> : vector<8x128xf32>
    %23 = vector.multi_reduction <add>, %16, %cst_10 [0] : vector<2x8x128xf32> to vector<8x128xf32>
    %24 = vector.shape_cast %23 : vector<8x128xf32> to vector<1x8x128xf32>
    %cst_11 = arith.constant 2.000000e+00 : f32
    %25 = vector.broadcast %cst_11 : f32 to vector<1x8x128xf32>
    %26 = arith.divf %24, %25 : vector<1x8x128xf32>
    %27 = vector.broadcast %26 : vector<1x8x128xf32> to vector<2x8x128xf32>
    %28 = arith.subf %16, %27 : vector<2x8x128xf32>
    %c0_12 = arith.constant 0 : index
    %c0_13 = arith.constant 0 : index
    %c0_14 = arith.constant 0 : index
    %c0_15 = arith.constant 0 : index
    %29 = vector.load %arg4[%c0_12, %c0_13, %c0_14, %c0_15] : memref<1x3x2x128xf32, #tpu.memory_space<vmem>>, vector<1x1x2x128xf32>
    %30 = vector.shape_cast %29 : vector<1x1x2x128xf32> to vector<2x128xf32>
    %31 = arith.mulf %22, %22 : vector<2x8x128xf32>
    %cst_16 = arith.constant dense<0.000000e+00> : vector<2x128xf32>
    %32 = vector.multi_reduction <add>, %31, %cst_16 [1] : vector<2x8x128xf32> to vector<2x128xf32>
    %33 = arith.addf %30, %32 : vector<2x128xf32>
    %c0_17 = arith.constant 0 : index
    %c0_18 = arith.constant 0 : index
    %c0_19 = arith.constant 0 : index
    %c0_20 = arith.constant 0 : index
    %34 = vector.load %arg4[%c0_17, %c0_18, %c0_19, %c0_20] : memref<1x3x2x128xf32, #tpu.memory_space<vmem>>, vector<1x1x2x128xf32>
    %35 = vector.shape_cast %34 : vector<1x1x2x128xf32> to vector<2x128xf32>
    %36 = vector.shape_cast %33 : vector<2x128xf32> to vector<1x1x2x128xf32>
    tpu.vector_store %arg4[%c0_17, %c0_18, %c0_19, %c0_20], %36 {strides = array<i32>} : memref<1x3x2x128xf32, #tpu.memory_space<vmem>>, vector<1x1x2x128xf32>,
    %c0_21 = arith.constant 0 : index
    %c1 = arith.constant 1 : index
    %c0_22 = arith.constant 0 : index
    %c0_23 = arith.constant 0 : index
    %37 = vector.load %arg4[%c0_21, %c1, %c0_22, %c0_23] : memref<1x3x2x128xf32, #tpu.memory_space<vmem>>, vector<1x1x2x128xf32>
    %38 = vector.shape_cast %37 : vector<1x1x2x128xf32> to vector<2x128xf32>
    %39 = arith.mulf %28, %28 : vector<2x8x128xf32>
    %cst_24 = arith.constant dense<0.000000e+00> : vector<2x128xf32>
    %40 = vector.multi_reduction <add>, %39, %cst_24 [1] : vector<2x8x128xf32> to vector<2x128xf32>
    %41 = arith.addf %38, %40 : vector<2x128xf32>
    %c0_25 = arith.constant 0 : index
    %c1_26 = arith.constant 1 : index
    %c0_27 = arith.constant 0 : index
    %c0_28 = arith.constant 0 : index
    %42 = vector.load %arg4[%c0_25, %c1_26, %c0_27, %c0_28] : memref<1x3x2x128xf32, #tpu.memory_space<vmem>>, vector<1x1x2x128xf32>
    %43 = vector.shape_cast %42 : vector<1x1x2x128xf32> to vector<2x128xf32>
    %44 = vector.shape_cast %41 : vector<2x128xf32> to vector<1x1x2x128xf32>
    tpu.vector_store %arg4[%c0_25, %c1_26, %c0_27, %c0_28], %44 {strides = array<i32>} : memref<1x3x2x128xf32, #tpu.memory_space<vmem>>, vector<1x1x2x128xf32>,
    %c0_29 = arith.constant 0 : index
    %c2 = arith.constant 2 : index
    %c0_30 = arith.constant 0 : index
    %c0_31 = arith.constant 0 : index
    %45 = vector.load %arg4[%c0_29, %c2, %c0_30, %c0_31] : memref<1x3x2x128xf32, #tpu.memory_space<vmem>>, vector<1x1x2x128xf32>
    %46 = vector.shape_cast %45 : vector<1x1x2x128xf32> to vector<2x128xf32>
    %47 = arith.mulf %22, %28 : vector<2x8x128xf32>
    %cst_32 = arith.constant dense<0.000000e+00> : vector<2x128xf32>
    %48 = vector.multi_reduction <add>, %47, %cst_32 [1] : vector<2x8x128xf32> to vector<2x128xf32>
    %49 = arith.addf %46, %48 : vector<2x128xf32>
    %c0_33 = arith.constant 0 : index
    %c2_34 = arith.constant 2 : index
    %c0_35 = arith.constant 0 : index
    %c0_36 = arith.constant 0 : index
    %50 = vector.load %arg4[%c0_33, %c2_34, %c0_35, %c0_36] : memref<1x3x2x128xf32, #tpu.memory_space<vmem>>, vector<1x1x2x128xf32>
    %51 = vector.shape_cast %50 : vector<1x1x2x128xf32> to vector<2x128xf32>
    %52 = vector.shape_cast %49 : vector<2x128xf32> to vector<1x1x2x128xf32>
    tpu.vector_store %arg4[%c0_33, %c2_34, %c0_35, %c0_36], %52 {strides = array<i32>} : memref<1x3x2x128xf32, #tpu.memory_space<vmem>>, vector<1x1x2x128xf32>,
    return
  }
  func.func @transform_0(%arg0: i32, %arg1: i32) -> (i32, i32, i32) {
    %c1_i32 = arith.constant 1 : i32
    %0 = arith.muli %arg0, %c1_i32 : i32
    %1 = arith.addi %0, %arg1 : i32
    %c0_i32 = arith.constant 0 : i32
    %c0_i32_0 = arith.constant 0 : i32
    %c0_i32_1 = arith.constant 0 : i32
    return %c0_i32, %1, %c0_i32_0 : i32, i32, i32
  }
  func.func @transform_1(%arg0: i32, %arg1: i32) -> (i32, i32, i32) {
    %c1_i32 = arith.constant 1 : i32
    %0 = arith.muli %arg0, %c1_i32 : i32
    %1 = arith.addi %0, %arg1 : i32
    %c0_i32 = arith.constant 0 : i32
    %c0_i32_0 = arith.constant 0 : i32
    %c0_i32_1 = arith.constant 0 : i32
    return %c0_i32, %1, %c0_i32_0 : i32, i32, i32
  }
  func.func @transform_2(%arg0: i32, %arg1: i32) -> (i32, i32, i32, i32) {
    %c0_i32 = arith.constant 0 : i32
    %c0_i32_0 = arith.constant 0 : i32
    %c0_i32_1 = arith.constant 0 : i32
    %c0_i32_2 = arith.constant 0 : i32
    return %arg0, %c0_i32, %c0_i32_0, %c0_i32_1 : i32, i32, i32, i32
  }
}

</mosaic_0001>

<llo_original>
// kernel: tpu_custom_call.1
$region0: #{tpu_custom_call.1}
  #allocation0 [shape = 'u32[]', space=smem, size = 0x4, offset = 0x4, fixed_abs, tag = 'smem constant byte address 0x4 - core index']
  #allocation1 [shape = 'u32[144,128]{1,0:T(1,128)}', space=vmem, size = 0x12000, scoped, tag = 'internal scratch']
  %s0 = inlined_call_operand.hbm [shape: f32[2,8,128], index: 0, kind: input, shape index: {}]
  %s1 = inlined_call_operand.hbm [shape: f32[2,8,128], index: 1, kind: input, shape index: {}]
  %s2 = inlined_call_operand.hbm [shape: f32[1,3,2,128], index: 2, kind: output, shape index: {}]
  %s3 = sld [smem:[#allocation0]]
  $region30: #{tpu_custom_call.1} parent=0
    _
  %s5 = ssub.s32 1, %s3
  %s6 = scalar_select 0, %s5, %s3
  $region1: #{tpu_custom_call.1} parent=0
    #allocation2 [shape = 'u8[8192]{0}', space=vmem, size = 0x2000, scoped, tag = 'input window, operand 0, single buffered']
    #allocation3 [shape = 's32[1]{0}', space=sflag, size = 0x4, scoped, tag = 'scoped memory for tpu_custom_call.1']
    #allocation4 [shape = 's32[1]{0}', space=sflag, size = 0x4, scoped, tag = 'scoped memory for tpu_custom_call.1']
    #allocation5 [shape = 'u8[8192]{0}', space=vmem, size = 0x2000, scoped, tag = 'input window, operand 1, single buffered']
    #allocation6 [shape = 's32[1]{0}', space=sflag, size = 0x4, scoped, tag = 'scoped memory for tpu_custom_call.1']
    #allocation7 [shape = 'u8[3072]{0}', space=vmem, size = 0xc00, scoped, tag = 'output window, operand 0, single buffered']
    %7 = vsyncpa [#allocation3], 0
    %8 = vsyncpa [#allocation6], 0
    %9 = vsyncpa [#allocation4], 0
    // Predicated region
    $region2: #{tpu_custom_call.1} parent=1 // pred_check
      _
    $region3: #{tpu_custom_call.1} parent=1 // pred_check_branch
      %11 = sbr.rel (0) target = $region5
    $region4: #{tpu_custom_call.1} parent=1 // pred_region
      %s12 = sadd.s32 0, 0
      %s14 = ssub.s32 256, 256
      %15 = vsyncadd [#allocation3], %s14
      %s16 = smul.addr %s12, 128
      %s17 = scalar_lea.hbm %s0, %s16
      %s18 = sshll.u32 [#allocation2], 4
      %s19 = int_to_ptr.vmem [resolvable:$true] %s18
      %24 = dma.hbm_to_vmem [thread:$0]  %s17, 256, %s19, [#allocation3], 128, 128, 8
    $region5: #{tpu_custom_call.1} parent=1 // pred_fallthru
      _
    // Predicated region
    $region6: #{tpu_custom_call.1} parent=1 // pred_check
      _
    $region7: #{tpu_custom_call.1} parent=1 // pred_check_branch
      %26 = sbr.rel (0) target = $region9
    $region8: #{tpu_custom_call.1} parent=1 // pred_region
      %s27 = sadd.s32 0, 0
      %s29 = ssub.s32 256, 256
      %30 = vsyncadd [#allocation6], %s29
      %s31 = smul.addr %s27, 128
      %s32 = scalar_lea.hbm %s1, %s31
      %s33 = sshll.u32 [#allocation5], 4
      %s34 = int_to_ptr.vmem [resolvable:$true] %s33
      %39 = dma.hbm_to_vmem [thread:$0]  %s32, 256, %s34, [#allocation6], 128, 128, 8
    $region9: #{tpu_custom_call.1} parent=1 // pred_fallthru
      _
    // Predicated region
    $region10: #{tpu_custom_call.1} parent=1 // pred_check
      _
    $region11: #{tpu_custom_call.1} parent=1 // pred_check_branch
      %41 = sbr.rel (0) target = $region13
    $region12: #{tpu_custom_call.1} parent=1 // pred_region
      %42 = dma.done [#allocation3], 256
    $region13: #{tpu_custom_call.1} parent=1 // pred_fallthru
      _
    // Predicated region
    $region14: #{tpu_custom_call.1} parent=1 // pred_check
      _
    $region15: #{tpu_custom_call.1} parent=1 // pred_check_branch
      %44 = sbr.rel (0) target = $region17
    $region16: #{tpu_custom_call.1} parent=1 // pred_region
      %45 = dma.done [#allocation6], 256
    $region17: #{tpu_custom_call.1} parent=1 // pred_fallthru
      _
    %s46 = sadd.s32 0, 0
    %s47 = sadd.s32 0, 0
    %p48 = scmp.eq.s32.totalorder 0, 0
    // Predicated region
    $region18: #{tpu_custom_call.1} parent=1 // pred_check
      %p49 = pneg %p48
    $region19: #{tpu_custom_call.1} parent=1 // pred_check_branch
      %51 = sbr.rel (%p49) target = $region21
    $region20: #{tpu_custom_call.1} parent=1 // pred_region
      %52 = vst [vmem:[#allocation7] sm:$0x3] 0.0
      %53 = vst [vmem:[#allocation7 + $0x2] sm:$0x3] 0.0
      %54 = vst [vmem:[#allocation7 + $0x4] sm:$0x3] 0.0
    $region21: #{tpu_custom_call.1} parent=1 // pred_fallthru
      _
    %v55 = vld [vmem:[#allocation2] sm:$0xff]
    %v56 = vld [vmem:[#allocation2 + $0x8] sm:$0xff]
    %v57 = vld [vmem:[#allocation5] sm:$0xff]
    %v58 = vld [vmem:[#allocation5 + $0x8] sm:$0xff]
    %s59 = sadd.s32 0, 0
    %s60 = smul.u32 %s59, 8
    %v61 = vlaneseq
    %v62 = vshrl.u32 %v61, 7
    %v63 = vstv %s60
    %v64 = vadd.s32 %v63, %v62
    %vm65 = vcmp.lt.s32.totalorder %v64, 8
    %v66 = vsel %vm65, %v55, 0.0
    %v67 = vsel %vm65, %v56, 0.0
    %v68 = vsel %vm65, %v57, 0.0
    %v69 = vsel %vm65, %v58, 0.0
    %v70 = vadd.f32 %v66, %v67
    %v71 = vrcp.pop 2.0
    %v72 = vmul.f32 %v70, %v71
    %v73 = vsub.f32 %v66, %v72
    %v74 = vsub.f32 %v67, %v72
    %v75 = vadd.f32 %v68, %v69
    %v76 = vmul.f32 %v75, %v71
    %v77 = vsub.f32 %v68, %v76
    %v78 = vsub.f32 %v69, %v76
    %v79 = vld [vmem:[#allocation7] sm:$0x3]
    %v80 = vmul.f32 %v73, %v73
    %v81 = vmul.f32 %v74, %v74
    %v82 = vrot.slane %v80, 4
    %v83 = vadd.f32 %v80, %v82
    %v84 = vrot.slane %v83, 2
    %v85 = vadd.f32 %v83, %v84
    %v86 = vrot.slane %v85, 1
    %v87 = vadd.f32 %v85, %v86
    %v88 = vrot.slane %v81, 4
    %v89 = vadd.f32 %v81, %v88
    %v90 = vrot.slane %v89, 2
    %v91 = vadd.f32 %v89, %v90
    %v92 = vrot.slane %v91, 1
    %v93 = vadd.f32 %v91, %v92
    %vm96 = vcmask 1041409
    %v97 = vsel %vm96, %v93, %v87
    %v99 = vadd.f32 %v79, %v97
    %100 = vst [vmem:[#allocation7] sm:$0x3] %v99
    %s101 = scalar_lea.vmem [#allocation7], 2
    %v102 = vld [vmem:[%s101] sm:$0x3]
    %v103 = vmul.f32 %v77, %v77
    %v104 = vmul.f32 %v78, %v78
    %v105 = vrot.slane %v103, 4
    %v106 = vadd.f32 %v103, %v105
    %v107 = vrot.slane %v106, 2
    %v108 = vadd.f32 %v106, %v107
    %v109 = vrot.slane %v108, 1
    %v110 = vadd.f32 %v108, %v109
    %v111 = vrot.slane %v104, 4
    %v112 = vadd.f32 %v104, %v111
    %v113 = vrot.slane %v112, 2
    %v114 = vadd.f32 %v112, %v113
    %v115 = vrot.slane %v114, 1
    %v116 = vadd.f32 %v114, %v115
    %v119 = vsel %vm96, %v116, %v110
    %v121 = vadd.f32 %v102, %v119
    %122 = vst [vmem:[%s101] sm:$0x3] %v121
    %s123 = scalar_lea.vmem [#allocation7], 4
    %v124 = vld [vmem:[%s123] sm:$0x3]
    %v125 = vmul.f32 %v73, %v77
    %v126 = vmul.f32 %v74, %v78
    %v127 = vrot.slane %v125, 4
    %v128 = vadd.f32 %v125, %v127
    %v129 = vrot.slane %v128, 2
    %v130 = vadd.f32 %v128, %v129
    %v131 = vrot.slane %v130, 1
    %v132 = vadd.f32 %v130, %v131
    %v133 = vrot.slane %v126, 4
    %v134 = vadd.f32 %v126, %v133
    %v135 = vrot.slane %v134, 2
    %v136 = vadd.f32 %v134, %v135
    %v137 = vrot.slane %v136, 1
    %v138 = vadd.f32 %v136, %v137
    %v141 = vsel %vm96, %v138, %v132
    %v143 = vadd.f32 %v124, %v141
    %144 = vst [vmem:[%s123] sm:$0x3] %v143
    // Predicated region
    $region22: #{tpu_custom_call.1} parent=1 // pred_check
      _
    $region23: #{tpu_custom_call.1} parent=1 // pred_check_branch
      %146 = sbr.rel (0) target = $region25
    $region24: #{tpu_custom_call.1} parent=1 // pred_region
      %s148 = ssub.s32 96, 96
      %149 = vsyncadd [#allocation4], %s148
      %s150 = sshll.u32 [#allocation7], 4
      %s151 = int_to_ptr.vmem [resolvable:$true] %s150
      %156 = dma.vmem_to_hbm [thread:$0]  %s151, 96, %s2, [#allocation4], 32, 32, 2
    $region25: #{tpu_custom_call.1} parent=1 // pred_fallthru
      _
    // Predicated region
    $region26: #{tpu_custom_call.1} parent=1 // pred_check
      _
    $region27: #{tpu_custom_call.1} parent=1 // pred_check_branch
      %158 = sbr.rel (0) target = $region29
    $region28: #{tpu_custom_call.1} parent=1 // pred_region
      %159 = dma.done [#allocation4], 96
    $region29: #{tpu_custom_call.1} parent=1 // pred_fallthru
      _
    %160 = vsyncpa [#allocation3], 1
    %161 = vsyncpa [#allocation6], 1
    %162 = vsyncpa [#allocation4], 1

</llo_original>
